<compile_context>
chip_gen: v7x
topology: tpu7x:2x2x1
jax: 0.10.0
libtpu: 0.0.40
codegen_flags: <defaults>
</compile_context>

<pallas_src>
import functools

import jax
import jax.numpy as jnp
from jax import lax
from jax.experimental import pallas as pl
from jax.experimental.pallas import tpu as pltpu


def self_attention_kernel(x_ref, w_ref, o_ref, *, tq, tk):
    xb = x_ref[...]                                   # (C, L)        bf16 operand
    w = w_ref[...]                                    # (Tq+2Tk, C)   bf16 operand
    mxu_dtype = xb.dtype

    # Fused Q/K/V projection: a single MXU push, f32 accumulation.
    qkv = jnp.dot(w, xb, preferred_element_type=jnp.float32)   # (Tq+2Tk, L) f32
    q = qkv[:tq]                                      # (Tq, L)
    k = qkv[tq:tq + tk]                               # (Tk, L)
    v = qkv[tq + tk:]                                 # (Tk, L)

    # Attention scores: contract over L without materializing k.T
    # (the MXU consumes the transposed operand directly).
    scores = lax.dot_general(
        q.astype(mxu_dtype), k.astype(mxu_dtype),
        dimension_numbers=(((1,), (1,)), ((), ())),
        preferred_element_type=jnp.float32)           # (Tq, Tk) f32

    # Softmax over the key axis (torch dim=2), all in f32; the reciprocal
    # lowers to the otherwise-idle EUP slot.
    m = jnp.max(scores, axis=-1, keepdims=True)
    p = jnp.exp(scores - m)
    a = p * pl.reciprocal(jnp.sum(p, axis=-1, keepdims=True), approx=True)

    # Weighted sum of values (bf16 MXU operands, f32 accumulation).
    y = jnp.dot(a.astype(mxu_dtype), v.astype(mxu_dtype),
                preferred_element_type=jnp.float32)   # (Tq, L) f32
    o_ref[...] = y.astype(o_ref.dtype)


def self_attention(x, wq, wk, wv, *, mxu_dtype=jnp.bfloat16):
    """Pallas TPU self-attention.  x: (B, C, L); w*: (T*, C).  Returns (B, Tq, L)."""
    B, C, L = x.shape
    Tq = wq.shape[0]
    Tk = wk.shape[0]
    assert wq.shape == (Tq, C) and wk.shape == (Tk, C) and wv.shape == (Tk, C)
    out_dtype = x.dtype

    # Fuse the three kernel-size-1 conv weights into one channel-mixing matrix.
    w_fused = jnp.concatenate([wq, wk, wv], axis=0)   # (Tq + 2*Tk, C)
    if mxu_dtype is not None:
        x = x.astype(mxu_dtype)
        w_fused = w_fused.astype(mxu_dtype)

    kernel = functools.partial(self_attention_kernel, tq=Tq, tk=Tk)

    # NOTE: at production sizes keep L a multiple of 128 (lane-dense, unmasked
    # output stores -- the single biggest measured lever) and tile L
    # flash-style if (C + Tq + 2*Tk) * L per-step blocks approach the VMEM
    # budget (64 MiB physical on v7x, 128 MiB on v5e/v6e).
    return pl.pallas_call(
        kernel,
        out_shape=jax.ShapeDtypeStruct((B, Tq, L), out_dtype),
        grid_spec=pltpu.PrefetchScalarGridSpec(
            num_scalar_prefetch=0,
            grid=(B,),                       # one batch per step -> >=2 steps,
            in_specs=[                       # pipelined DMA, megacore over B
                pl.BlockSpec((None, C, L), lambda b: (b, 0, 0)),   # x (squeezed)
                pl.BlockSpec((Tq + 2 * Tk, C), lambda b: (0, 0)),  # fused weights
            ],
            out_specs=pl.BlockSpec((None, Tq, L), lambda b: (b, 0, 0)),
        ),
        compiler_params=pltpu.CompilerParams(
            dimension_semantics=("parallel",)),
    )(x, w_fused)


if __name__ == "__main__":
    B, C_in, L = 2, 4, 16     # batch, in_channels, sequence length
    Tq, Tk = 8, 8             # query_channels, key_channels

    key = jax.random.PRNGKey(0)
    kx, kq, kk, kv = jax.random.split(key, 4)
    x = jax.random.normal(kx, (B, C_in, L), dtype=jnp.float32)

    # deterministic init mimicking PyTorch Conv1d default U(-1/sqrt(C_in), 1/sqrt(C_in))
    bound = 1.0 / float(C_in) ** 0.5
    wq = jax.random.uniform(kq, (Tq, C_in), minval=-bound, maxval=bound, dtype=jnp.float32)
    wk = jax.random.uniform(kk, (Tk, C_in), minval=-bound, maxval=bound, dtype=jnp.float32)
    wv = jax.random.uniform(kv, (Tk, C_in), minval=-bound, maxval=bound, dtype=jnp.float32)

    y = self_attention(x, wq, wk, wv)
    jax.block_until_ready(y)

    # plain-JAX f32 reference (matches the PyTorch module exactly)
    q_ref = jnp.einsum("tc,bcl->btl", wq, x)
    k_ref = jnp.einsum("tc,bcl->btl", wk, x)
    v_ref = jnp.einsum("tc,bcl->btl", wv, x)
    a_ref = jax.nn.softmax(jnp.einsum("bql,bkl->bqk", q_ref, k_ref), axis=2)
    y_ref = jnp.einsum("bqk,bkl->bql", a_ref, v_ref)

    assert y.shape == (B, Tq, L)
    # Tolerance relaxed vs. pure-f32: MXU operands are bf16 (accumulation and
    # softmax remain f32).
    assert jnp.allclose(y, y_ref, atol=5e-2, rtol=5e-2), \
        f"max abs err = {float(jnp.max(jnp.abs(y - y_ref)))}"

    print("KERNEL_OK")
</pallas_src>

<mosaic_0001>
module attributes {stable_mosaic.version = 11 : i64} {
  func.func @self_attention_kernel(%arg0: i32, %arg1: memref<1x4x16xbf16, #tpu.memory_space<vmem>>, %arg2: memref<24x4xbf16, #tpu.memory_space<vmem>>, %arg3: memref<1x8x16xf32, #tpu.memory_space<vmem>>) attributes {dimension_semantics = [#tpu.dimension_semantics<parallel>], iteration_bounds = array<i64: 2>, scalar_prefetch = 0 : i64, scratch_operands = 0 : i64, tpu.core_type = #tpu.core_type<tc>, window_params = [{transform_indices = @transform_0, window_bounds = array<i64: 1, 4, 16>}, {pipeline_mode = #tpu.pipeline_mode<synchronous>, transform_indices = @transform_1, window_bounds = array<i64: 24, 4>}, {transform_indices = @transform_2, window_bounds = array<i64: 1, 8, 16>}]} {
    %c0 = arith.constant 0 : index
    %c0_0 = arith.constant 0 : index
    %c0_1 = arith.constant 0 : index
    %0 = vector.load %arg1[%c0, %c0_0, %c0_1] : memref<1x4x16xbf16, #tpu.memory_space<vmem>>, vector<1x4x16xbf16>
    %1 = vector.shape_cast %0 : vector<1x4x16xbf16> to vector<4x16xbf16>
    %c0_2 = arith.constant 0 : index
    %c0_3 = arith.constant 0 : index
    %2 = vector.load %arg2[%c0_2, %c0_3] : memref<24x4xbf16, #tpu.memory_space<vmem>>, vector<24x4xbf16>
    %cst = arith.constant dense<0.000000e+00> : vector<24x16xf32>
    %3 = tpu.matmul %2, %1, %cst {dimension_numbers = #tpu.dot_dimension_numbers<[1], [0], [0], [1], [0, 0, 1, 1], [], []>} : vector<24x4xbf16>, vector<4x16xbf16>, vector<24x16xf32> -> vector<24x16xf32>
    %4 = vector.extract_strided_slice %3 {offsets = [0, 0], sizes = [8, 16], strides = [1, 1]} : vector<24x16xf32> to vector<8x16xf32>
    %5 = vector.extract_strided_slice %3 {offsets = [8, 0], sizes = [8, 16], strides = [1, 1]} : vector<24x16xf32> to vector<8x16xf32>
    %6 = vector.extract_strided_slice %3 {offsets = [16, 0], sizes = [8, 16], strides = [1, 1]} : vector<24x16xf32> to vector<8x16xf32>
    %7 = arith.truncf %4 : vector<8x16xf32> to vector<8x16xbf16>
    %8 = arith.truncf %5 : vector<8x16xf32> to vector<8x16xbf16>
    %cst_4 = arith.constant dense<0.000000e+00> : vector<8x8xf32>
    %9 = tpu.matmul %7, %8, %cst_4 {dimension_numbers = #tpu.dot_dimension_numbers<[1], [1], [0], [0], [0, 0, 1, 0], [], []>} : vector<8x16xbf16>, vector<8x16xbf16>, vector<8x8xf32> -> vector<8x8xf32>
    %cst_5 = arith.constant dense<0xFF800000> : vector<8xf32>
    %10 = vector.multi_reduction <maximumf>, %9, %cst_5 [1] : vector<8x8xf32> to vector<8xf32>
    %11 = vector.shape_cast %10 : vector<8xf32> to vector<8x1xf32>
    %12 = vector.broadcast %11 : vector<8x1xf32> to vector<8x8xf32>
    %13 = arith.subf %9, %12 : vector<8x8xf32>
    %14 = math.exp %13 : vector<8x8xf32>
    %cst_6 = arith.constant dense<0.000000e+00> : vector<8xf32>
    %15 = vector.multi_reduction <add>, %14, %cst_6 [1] : vector<8x8xf32> to vector<8xf32>
    %16 = vector.shape_cast %15 : vector<8xf32> to vector<8x1xf32>
    %17 = tpu.reciprocal %16 {approx = true} : vector<8x1xf32> -> vector<8x1xf32>
    %18 = vector.broadcast %17 : vector<8x1xf32> to vector<8x8xf32>
    %19 = arith.mulf %14, %18 : vector<8x8xf32>
    %20 = arith.truncf %19 : vector<8x8xf32> to vector<8x8xbf16>
    %21 = arith.truncf %6 : vector<8x16xf32> to vector<8x16xbf16>
    %cst_7 = arith.constant dense<0.000000e+00> : vector<8x16xf32>
    %22 = tpu.matmul %20, %21, %cst_7 {dimension_numbers = #tpu.dot_dimension_numbers<[1], [0], [0], [1], [0, 0, 1, 1], [], []>} : vector<8x8xbf16>, vector<8x16xbf16>, vector<8x16xf32> -> vector<8x16xf32>
    %c0_8 = arith.constant 0 : index
    %c0_9 = arith.constant 0 : index
    %c0_10 = arith.constant 0 : index
    %23 = vector.load %arg3[%c0_8, %c0_9, %c0_10] : memref<1x8x16xf32, #tpu.memory_space<vmem>>, vector<1x8x16xf32>
    %24 = vector.shape_cast %23 : vector<1x8x16xf32> to vector<8x16xf32>
    %25 = vector.shape_cast %22 : vector<8x16xf32> to vector<1x8x16xf32>
    tpu.vector_store %arg3[%c0_8, %c0_9, %c0_10], %25 {strides = array<i32>} : memref<1x8x16xf32, #tpu.memory_space<vmem>>, vector<1x8x16xf32>,
    return
  }
  func.func @transform_0(%arg0: i32) -> (i32, i32, i32) {
    %c0_i32 = arith.constant 0 : i32
    %c0_i32_0 = arith.constant 0 : i32
    %c0_i32_1 = arith.constant 0 : i32
    return %arg0, %c0_i32, %c0_i32_0 : i32, i32, i32
  }
  func.func @transform_1(%arg0: i32) -> (i32, i32) {
    %c0_i32 = arith.constant 0 : i32
    %c0_i32_0 = arith.constant 0 : i32
    %c0_i32_1 = arith.constant 0 : i32
    return %c0_i32, %c0_i32_0 : i32, i32
  }
  func.func @transform_2(%arg0: i32) -> (i32, i32, i32) {
    %c0_i32 = arith.constant 0 : i32
    %c0_i32_0 = arith.constant 0 : i32
    %c0_i32_1 = arith.constant 0 : i32
    return %arg0, %c0_i32, %c0_i32_0 : i32, i32, i32
  }
}

</mosaic_0001>

<llo_original>
// kernel: tpu_custom_call.1
$region0: #{tpu_custom_call.1}
  #allocation0 [shape = 'u32[]', space=smem, size = 0x4, offset = 0x4, fixed_abs, tag = 'smem constant byte address 0x4 - core index']
  #allocation1 [shape = 'u32[144,128]{1,0:T(1,128)}', space=vmem, size = 0x12000, scoped, tag = 'internal scratch']
  %s0 = inlined_call_operand.vmem [shape: bf16[2,4,16], index: 0, kind: input, shape index: {}]
  %s1 = inlined_call_operand.vmem [shape: bf16[24,4], index: 1, kind: input, shape index: {}]
  %s2 = inlined_call_operand.hbm [shape: f32[2,8,16], index: 2, kind: output, shape index: {}]
  %s3 = sld [smem:[#allocation0]]
  $region41: #{tpu_custom_call.1} parent=0
    _
  %s5 = ssub.s32 1, %s3
  %s6 = scalar_select 0, %s5, %s3
  $region1: #{tpu_custom_call.1} parent=0
    #allocation2 [shape = 'u8[8192]{0}', space=vmem, size = 0x2000, scoped, tag = 'output window, operand 0']
    #allocation3 [shape = 's32[2]{0}', space=sflag, size = 0x8, scoped, tag = 'scoped memory for tpu_custom_call.1']
    %7 = vsyncpa [#allocation3], 0
    %s8 = scalar_lea.sflag [#allocation3], 1
    %9 = vsyncpa %s8, 0
    loop: start=0, step=1, limit=4
    $region2: #{tpu_custom_call.1} parent=1 // loop_pre_header
      _
    $region3: #{tpu_custom_call.1} parent=1 // loop_header
      %s11 = sphi 0, %s15
      %p12 = scmp.ge.s32.totalorder %s11, 4
      %s21 = sphi 0, %s23
      %s24 = sphi 0, %s21
      %s25 = sphi 0, %s24
      %s41 = sphi 0, %s25
      %s45 = sphi 0, %s45
      %s47 = sphi 0, %s45
      %s48 = sphi 0, %s47
      %s62 = sphi 0, %s48
      %s68 = sphi 0, %s70
      %s71 = sphi 0, %s68
      %s72 = sphi 0, %s71
      %s88 = sphi 0, %s72
    $region4: #{tpu_custom_call.1} parent=1 // loop_header_branch
      %14 = sbr.rel (%p12) target = $region8
    $region5: #{tpu_custom_call.1} parent=1 // loop_body
      %s16 = ssub.s32 %s11, 1
      %s17 = ssub.s32 %s11, 2
      %s18 = sadd.s32 %s11, 1
      %s19 = ssub.s32 %s11, %s18
      %p20 = scmp.eq.s32.totalorder %s19, 0
      %s22 = sadd.s32 %s21, 1
      %s23 = scalar_select %p20, %s21, %s22
      %p26 = pneg %p20
      %p27 = scmp.eq.s32.totalorder %s11, 1
      %p28 = por %p26, %p27
      %p29 = scmp.ne.s32.totalorder %s21, %s24
      %p30 = scmp.eq.s32.totalorder %s11, 0
      %p31 = por %p29, %p30
      %p32 = scmp.ne.s32.totalorder %s21, %s24
      %p33 = scmp.eq.s32.totalorder %s16, 1
      %p34 = por %p32, %p33
      %p35 = scmp.ne.s32.totalorder %s24, %s25
      %p36 = scmp.eq.s32.totalorder %s16, 0
      %p37 = por %p35, %p36
      %p38 = scmp.ne.s32.totalorder %s24, %s25
      %p39 = scmp.eq.s32.totalorder %s17, 1
      %p40 = por %p38, %p39
      %p42 = scmp.ne.s32.totalorder %s25, %s41
      %p43 = scmp.eq.s32.totalorder %s17, 0
      %p44 = por %p42, %p43
      %s46 = sadd.s32 %s45, 1
      %p49 = scmp.eq.s32.totalorder %s11, 1
      %p50 = scmp.ne.s32.totalorder %s45, %s47
      %p51 = scmp.eq.s32.totalorder %s11, 0
      %p52 = por %p50, %p51
      %p53 = scmp.ne.s32.totalorder %s45, %s47
      %p54 = scmp.eq.s32.totalorder %s16, 1
      %p55 = por %p53, %p54
      %p56 = scmp.ne.s32.totalorder %s47, %s48
      %p57 = scmp.eq.s32.totalorder %s16, 0
      %p58 = por %p56, %p57
      %p59 = scmp.ne.s32.totalorder %s47, %s48
      %p60 = scmp.eq.s32.totalorder %s17, 1
      %p61 = por %p59, %p60
      %p63 = scmp.ne.s32.totalorder %s48, %s62
      %p64 = scmp.eq.s32.totalorder %s17, 0
      %p65 = por %p63, %p64
      %s66 = ssub.s32 %s11, %s18
      %p67 = scmp.eq.s32.totalorder %s66, 0
      %s69 = sadd.s32 %s68, 1
      %s70 = scalar_select %p67, %s68, %s69
      %p73 = pneg %p67
      %p74 = scmp.eq.s32.totalorder %s11, 1
      %p75 = por %p73, %p74
      %p76 = scmp.ne.s32.totalorder %s68, %s71
      %p77 = scmp.eq.s32.totalorder %s11, 0
      %p78 = por %p76, %p77
      %p79 = scmp.ne.s32.totalorder %s68, %s71
      %p80 = scmp.eq.s32.totalorder %s16, 1
      %p81 = por %p79, %p80
      %p82 = scmp.ne.s32.totalorder %s71, %s72
      %p83 = scmp.eq.s32.totalorder %s16, 0
      %p84 = por %p82, %p83
      %p85 = scmp.ne.s32.totalorder %s71, %s72
      %p86 = scmp.eq.s32.totalorder %s17, 1
      %p87 = por %p85, %p86
      %p89 = scmp.ne.s32.totalorder %s72, %s88
      %p90 = scmp.eq.s32.totalorder %s17, 0
      %p91 = por %p89, %p90
      %p92 = scmp.le.s32.totalorder 1, %s11
      %p93 = scmp.lt.s32.totalorder %s11, 3
      %p94 = pnand %p92, %p93
      %p95 = pneg %p94
      // Predicated region
      $region9: #{tpu_custom_call.1} parent=5 // pred_check
        _
      $region10: #{tpu_custom_call.1} parent=5 // pred_check_branch
        %97 = sbr.rel (%p94) target = $region12
      $region11: #{tpu_custom_call.1} parent=5 // pred_region
        %s98 = ssub.s32 %s11, 1
        // Predicated region
        $region13: #{tpu_custom_call.1} parent=11 // pred_check
          %p99 = pneg %p58
        $region14: #{tpu_custom_call.1} parent=11 // pred_check_branch
          %101 = sbr.rel (%p99) target = $region16
        $region15: #{tpu_custom_call.1} parent=11 // pred_region
          _
        $region16: #{tpu_custom_call.1} parent=11 // pred_fallthru
          _
      $region12: #{tpu_custom_call.1} parent=5 // pred_fallthru
        _
      %p102 = scmp.lt.s32.totalorder %s11, 2
      // Predicated region
      $region17: #{tpu_custom_call.1} parent=5 // pred_check
        %p103 = pneg %p102
      $region18: #{tpu_custom_call.1} parent=5 // pred_check_branch
        %105 = sbr.rel (%p103) target = $region20
      $region19: #{tpu_custom_call.1} parent=5 // pred_region
        // Predicated region
        $region21: #{tpu_custom_call.1} parent=19 // pred_check
          %p106 = pneg %p31
        $region22: #{tpu_custom_call.1} parent=19 // pred_check_branch
          %108 = sbr.rel (%p106) target = $region24
        $region23: #{tpu_custom_call.1} parent=19 // pred_region
          %p109 = scmp.lt.s32.totalorder %s11, 1
          %s110 = scalar_select %p109, %s11, 1
          %s111 = smul.addr %s110, 2
          %s112 = scalar_lea.vmem %s0, %s111
        $region24: #{tpu_custom_call.1} parent=19 // pred_fallthru
          _
      $region20: #{tpu_custom_call.1} parent=5 // pred_fallthru
        _
      %p113 = scmp.le.s32.totalorder 1, %s11
      %p114 = scmp.lt.s32.totalorder %s11, 3
      %p115 = pnand %p113, %p114
      %p116 = pneg %p115
      // Predicated region
      $region25: #{tpu_custom_call.1} parent=5 // pred_check
        _
      $region26: #{tpu_custom_call.1} parent=5 // pred_check_branch
        %118 = sbr.rel (%p115) target = $region28
      $region27: #{tpu_custom_call.1} parent=5 // pred_region
        %s119 = ssub.s32 %s11, 1
        %p120 = scmp.lt.s32.totalorder %s16, 1
        %s121 = scalar_select %p120, %s16, 1
        %s122 = smul.addr %s121, 2
        %s123 = scalar_lea.vmem %s0, %s122
        %p124 = pneg %p37
        %p125 = pneg %p34
        %p126 = pneg %p58
        %p127 = pneg %p55
        %p128 = pneg %p84
        %p129 = pneg %p81
        %s130 = sand.u32 %s71, 1
        %s131 = scalar_lea.sflag [#allocation3], %s130
        %s132 = sand.u32 %s71, 1
        %s133 = smul.addr %s132, 8
        %s134 = scalar_lea.vmem [#allocation2], %s133
        %p135 = scmp.lt.s32.totalorder %s16, 1
        %s136 = scalar_select %p135, %s16, 1
        %s137 = smul.addr %s136, 2
        %s138 = scalar_lea.vmem %s0, %s137
        %v140 = vld [vmem:[%s138] sm:$0x3]
        %v141 = vld [vmem:[%s1] sm:$0xf]
        %v142 = vld [vmem:[%s1 + $0x4] sm:$0xf]
        %v143 = vld [vmem:[%s1 + $0x8] sm:$0xf]
        %v147 = vunpack.c.l.b16 %v141
        %v148 = vunpack.c.l.b16 %v142
        %v149 = vunpack.c.l.b16 %v143
        %v150 = vpack.c.b16 %v148, %v147
        %v151 = vpack.c.b16 %v149, %v149
        %vm152 = vcmask 31744
        %v154 = vsel %vm152, %v150, 0
        %v157 = vsel %vm152, %v151, 0
        %vm159 = vcmask 1041408
        %v161 = vsel %vm159, %v140, 0
        %163 = vmatprep.subr.bf16.mxu0 0
        %164 = vmatpush1.bf16.msra.mxu0 %v161
        %165 = vmatprep.subr.bf16.mxu0 0
        %166 = vmatpush1.bf16.msra.mxu0 0
        %167 = vmatprep.subr.bf16.mxu0 0
        %168 = vmatpush1.bf16.msra.mxu0 0
        %169 = vmatprep.subr.bf16.mxu0 0
        %170 = vmatpush1.bf16.msra.mxu0 0
        %171 = vmatprep.subr.bf16.mxu0 0
        %172 = vmatpush1.bf16.msra.mxu0 0
        %173 = vmatprep.subr.bf16.mxu0 0
        %174 = vmatpush1.bf16.msra.mxu0 0
        %175 = vmatprep.subr.bf16.mxu0 0
        %176 = vmatpush1.bf16.msra.mxu0 0
        %177 = vmatprep.subr.bf16.mxu0 0
        %178 = vmatpush1.bf16.msra.mxu0 0
        %179 = vmatprep.subr.bf16.mxu0 0
        %180 = vmatpush1.bf16.msra.mxu0 0
        %181 = vmatprep.subr.bf16.mxu0 0
        %182 = vmatpush1.bf16.msra.mxu0 0
        %183 = vmatprep.subr.bf16.mxu0 0
        %184 = vmatpush1.bf16.msra.mxu0 0
        %185 = vmatprep.subr.bf16.mxu0 0
        %186 = vmatpush1.bf16.msra.mxu0 0
        %187 = vmatprep.subr.bf16.mxu0 0
        %188 = vmatpush1.bf16.msra.mxu0 0
        %189 = vmatprep.subr.bf16.mxu0 0
        %190 = vmatpush1.bf16.msra.mxu0 0
        %191 = vmatprep.subr.bf16.mxu0 0
        %192 = vmatpush1.bf16.msra.mxu0 0
        %193 = vmatprep.subr.bf16.mxu0 0
        %194 = vmatpush1.bf16.msra.mxu0 0
        %195 = vmatprep.mubr.bf16.mxu0 0
        %196 = vmatmul.mubr.bf16.gmra.mrb[0].mxu0 %v154
        %v197 = vpop.f32.mrb[0].mxu0
        %v198 = vadd.f32 0.0, %v197
        %v199 = vpop.f32.mrb[0].mxu0
        %v200 = vpop.f32.mrb[0].mxu0
        %v201 = vadd.f32 0.0, %v200
        %v202 = vpop.f32.mrb[0].mxu0
        %203 = vmatprep.mubr.bf16.mxu0 0
        %204 = vmatmul.mubr.bf16.gmra.mrb[0].mxu0 %v157
        %v205 = vpop.f32.mrb[0].mxu0
        %v206 = vadd.f32 0.0, %v205
        %v207 = vpop.f32.mrb[0].mxu0
        %v208 = vpop.f32.mrb[0].mxu0
        %v209 = vpop.f32.mrb[0].mxu0
        %210 = vdwg.mxu0
        %v211 = vpack.c.bf16 %v198, %v198
        %v212 = vpack.c.bf16 %v201, %v201
        %vm213 = vcmask 130048
        %v215 = vsel %vm213, %v211, 0
        %v218 = vsel %vm213, %v212, 0
        %220 = vmatprep.subr.bf16.mxu0 0
        %221 = vmatpush1.bf16.xpose.msra.mxu0 %v218
        %222 = vmatprep.subr.bf16.mxu0 0
        %223 = vmatpush1.bf16.xpose.msra.mxu0 0
        %224 = vmatprep.subr.bf16.mxu0 0
        %225 = vmatpush1.bf16.xpose.msra.mxu0 0
        %226 = vmatprep.subr.bf16.mxu0 0
        %227 = vmatpush1.bf16.xpose.msra.mxu0 0
        %228 = vmatprep.subr.bf16.mxu0 0
        %229 = vmatpush1.bf16.xpose.msra.mxu0 0
        %230 = vmatprep.subr.bf16.mxu0 0
        %231 = vmatpush1.bf16.xpose.msra.mxu0 0
        %232 = vmatprep.subr.bf16.mxu0 0
        %233 = vmatpush1.bf16.xpose.msra.mxu0 0
        %234 = vmatprep.subr.bf16.mxu0 0
        %235 = vmatpush1.bf16.xpose.msra.mxu0 0
        %236 = vmatprep.subr.bf16.mxu0 0
        %237 = vmatpush1.bf16.xpose.msra.mxu0 0
        %238 = vmatprep.subr.bf16.mxu0 0
        %239 = vmatpush1.bf16.xpose.msra.mxu0 0
        %240 = vmatprep.subr.bf16.mxu0 0
        %241 = vmatpush1.bf16.xpose.msra.mxu0 0
        %242 = vmatprep.subr.bf16.mxu0 0
        %243 = vmatpush1.bf16.xpose.msra.mxu0 0
        %244 = vmatprep.subr.bf16.mxu0 0
        %245 = vmatpush1.bf16.xpose.msra.mxu0 0
        %246 = vmatprep.subr.bf16.mxu0 0
        %247 = vmatpush1.bf16.xpose.msra.mxu0 0
        %248 = vmatprep.subr.bf16.mxu0 0
        %249 = vmatpush1.bf16.xpose.msra.mxu0 0
        %250 = vmatprep.subr.bf16.mxu0 0
        %251 = vmatpush1.bf16.xpose.msra.mxu0 0
        %252 = vmatprep.mubr.bf16.mxu0 0
        %253 = vmatmul.mubr.bf16.gmra.mrb[0].mxu0 %v215
        %v254 = vpop.f32.mrb[0].mxu0
        %v255 = vadd.f32 0.0, %v254
        %v256 = vpop.f32.mrb[0].mxu0
        %v257 = vpop.f32.mrb[0].mxu0
        %v258 = vpop.f32.mrb[0].mxu0
        %259 = vdwg.mxu0
        %vm260 = vcmask 64512
        %v261 = vsel %vm260, %v255, -inf
        %262 = vmax.xlane.f32.xlu0 %v261
        %v263 = vpop.xlane.xlu0 %262
        %v264 = vsub.f32 %v255, %v263
        %v265 = vmul.f32 %v264, 1.442695
        %v266 = vpow.pop %v265
        %v267 = vsel %vm260, %v266, 0.0
        %268 = vadd.xlane.f32.xlu0 %v267
        %v269 = vpop.xlane.xlu0 %268
        %v270 = vrcp.pop %v269
        %v271 = vmul.f32 %v266, %v270
        %v272 = vpack.c.bf16 %v271, %v271
        %v273 = vpack.c.bf16 %v206, %v206
        %v275 = vsel %vm260, %v272, 0
        %vm277 = vcmask 1043456
        %v279 = vsel %vm277, %v273, 0
        %281 = vmatprep.subr.bf16.mxu0 0
        %282 = vmatpush1.bf16.msra.mxu0 %v279
        %283 = vmatprep.subr.bf16.mxu0 0
        %284 = vmatpush1.bf16.msra.mxu0 0
        %285 = vmatprep.subr.bf16.mxu0 0
        %286 = vmatpush1.bf16.msra.mxu0 0
        %287 = vmatprep.subr.bf16.mxu0 0
        %288 = vmatpush1.bf16.msra.mxu0 0
        %289 = vmatprep.subr.bf16.mxu0 0
        %290 = vmatpush1.bf16.msra.mxu0 0
        %291 = vmatprep.subr.bf16.mxu0 0
        %292 = vmatpush1.bf16.msra.mxu0 0
        %293 = vmatprep.subr.bf16.mxu0 0
        %294 = vmatpush1.bf16.msra.mxu0 0
        %295 = vmatprep.subr.bf16.mxu0 0
        %296 = vmatpush1.bf16.msra.mxu0 0
        %297 = vmatprep.subr.bf16.mxu0 0
        %298 = vmatpush1.bf16.msra.mxu0 0
        %299 = vmatprep.subr.bf16.mxu0 0
        %300 = vmatpush1.bf16.msra.mxu0 0
        %301 = vmatprep.subr.bf16.mxu0 0
        %302 = vmatpush1.bf16.msra.mxu0 0
        %303 = vmatprep.subr.bf16.mxu0 0
        %304 = vmatpush1.bf16.msra.mxu0 0
        %305 = vmatprep.subr.bf16.mxu0 0
        %306 = vmatpush1.bf16.msra.mxu0 0
        %307 = vmatprep.subr.bf16.mxu0 0
        %308 = vmatpush1.bf16.msra.mxu0 0
        %309 = vmatprep.subr.bf16.mxu0 0
        %310 = vmatpush1.bf16.msra.mxu0 0
        %311 = vmatprep.subr.bf16.mxu0 0
        %312 = vmatpush1.bf16.msra.mxu0 0
        %313 = vmatprep.mubr.bf16.mxu0 0
        %314 = vmatmul.mubr.bf16.gmra.mrb[0].mxu0 %v275
        %v315 = vpop.f32.mrb[0].mxu0
        %v316 = vadd.f32 0.0, %v315
        %v317 = vpop.f32.mrb[0].mxu0
        %v318 = vpop.f32.mrb[0].mxu0
        %v319 = vpop.f32.mrb[0].mxu0
        %320 = vdwg.mxu0
        %321 = vst.msk [vmem:[%s134] sm:$0xff] %vm213, %v316
        %s322 = sand.u32 %s71, 1
        %s323 = scalar_lea.sflag [#allocation3], %s322
        %s324 = sand.u32 %s71, 1
        %s325 = smul.addr %s324, 8
        %s326 = scalar_lea.vmem [#allocation2], %s325
        // Predicated region
        $region29: #{tpu_custom_call.1} parent=27 // pred_check
          %p327 = pneg %p81
        $region30: #{tpu_custom_call.1} parent=27 // pred_check_branch
          %329 = sbr.rel (%p327) target = $region32
        $region31: #{tpu_custom_call.1} parent=27 // pred_region
          %s331 = ssub.s32 128, 128
          %332 = vsyncadd %s323, %s331
          %s333 = smul.addr %s16, 128
          %s334 = scalar_lea.hbm %s2, %s333
          %s336 = sshll.u32 %s326, 4
          %s337 = int_to_ptr.vmem [resolvable:$true] %s336
          %339 = dma.vmem_to_hbm [thread:$0]  %s337, 128, %s334, %s323
        $region32: #{tpu_custom_call.1} parent=27 // pred_fallthru
          _
      $region28: #{tpu_custom_call.1} parent=5 // pred_fallthru
        _
      %p340 = scmp.le.s32.totalorder 2, %s11
      // Predicated region
      $region33: #{tpu_custom_call.1} parent=5 // pred_check
        %p341 = pneg %p340
      $region34: #{tpu_custom_call.1} parent=5 // pred_check_branch
        %343 = sbr.rel (%p341) target = $region36
      $region35: #{tpu_custom_call.1} parent=5 // pred_region
        %s344 = ssub.s32 %s11, 2
        // Predicated region
        $region37: #{tpu_custom_call.1} parent=35 // pred_check
          %p345 = pneg %p87
        $region38: #{tpu_custom_call.1} parent=35 // pred_check_branch
          %347 = sbr.rel (%p345) target = $region40
        $region39: #{tpu_custom_call.1} parent=35 // pred_region
          %s348 = sand.u32 %s72, 1
          %s349 = scalar_lea.sflag [#allocation3], %s348
          %s350 = sand.u32 %s72, 1
          %s351 = smul.addr %s350, 8
          %s352 = scalar_lea.vmem [#allocation2], %s351
          %353 = dma.done %s349, 128
        $region40: #{tpu_custom_call.1} parent=35 // pred_fallthru
          _
      $region36: #{tpu_custom_call.1} parent=5 // pred_fallthru
        _
    $region6: #{tpu_custom_call.1} parent=1 // loop_footer
      %s15 = sadd.s32 1, %s11
    $region7: #{tpu_custom_call.1} parent=1 // loop_footer_branch
      %10 = sbr.rel target = $region3
    $region8: #{tpu_custom_call.1} parent=1 // loop_exit
      _
    %354 = vsyncpa [#allocation3], 1
    %s355 = scalar_lea.sflag [#allocation3], 1
    %356 = vsyncpa %s355, 1

</llo_original>
